<compile_context>
chip_gen: v7x
topology: tpu7x:2x2x1
jax: 0.10.0
libtpu: 0.0.40
codegen_flags: <defaults>
</compile_context>

<pallas_src>
import jax
import jax.numpy as jnp
from jax.experimental import pallas as pl
from jax.experimental.pallas import tpu as pltpu

_LANE = 128      # lane width: last block dim should be a multiple of this
_SUBLANE_BF16 = 16  # bf16 sublane packing: keep batch tiles a multiple of 16 rows


def _round_up(v, m):
    return ((v + m - 1) // m) * m


def _device_kind():
    try:
        return jax.devices()[0].device_kind.lower()
    except Exception:   # best-effort hardware detection only
        return ""


def _epilogue_dtype(kind=None):
    kind = _device_kind() if kind is None else kind
    # v6e / v7x have a bf16 VALU path; keep f32 epilogue math elsewhere (v5e & older).
    return jnp.bfloat16 if ("v6" in kind or "v7" in kind) else jnp.float32


def _vmem_cap(kind):
    if "v7" in kind:
        return 48 << 20     # 64 MiB physical per TC: leave headroom for Mosaic scratch
    if any(v in kind for v in ("v4", "v5", "v6")):
        return 100 << 20    # 128 MiB physical VMEM
    return 48 << 20         # unknown chip: be conservative


def _pick_tile_b(Bf, two_cores):
    """Batch tile over the (folded) batch dim Bf."""
    sub = _SUBLANE_BF16
    Bp = _round_up(max(Bf, 1), sub)
    if Bp <= 1024 and not (two_cores and Bp >= 2 * sub):
        return Bp                                   # single grid step: no per-step overhead
    steps = max(2 if two_cores else 2, -(-Bp // 512))
    if two_cores and steps % 2:
        steps += 1                                  # even step count for the two TensorCores
    return max(sub, _round_up(-(-Bp // steps), sub))


def _make_kernel(epilogue_dtype):
    def kernel(x_ref, w1_ref, w2_ref, w3_ref, w4_ref, vec_ref, o_ref):
        # vec_ref rows: 0..3 = b1..b4 (f32), 4..6 = a1..a3 (f32), 7 = padding.
        # Cast to bf16 in-kernel (free VPU work); MXU accumulates in f32.
        h = x_ref[...].astype(jnp.bfloat16)

        def hidden_layer(h_bf, w_ref, b_row, a_row):
            acc = jnp.dot(h_bf, w_ref[...], preferred_element_type=jnp.float32)
            acc = (acc + b_row).astype(epilogue_dtype)      # bias add in f32, then epilogue dtype
            a = a_row.astype(epilogue_dtype)
            # Per-channel PReLU: x if x > 0 else alpha * x.
            return jnp.where(acc > 0, acc, a * acc).astype(jnp.bfloat16)

        h = hidden_layer(h, w1_ref, vec_ref[0:1, :], vec_ref[4:5, :])
        h = hidden_layer(h, w2_ref, vec_ref[1:2, :], vec_ref[5:6, :])
        h = hidden_layer(h, w3_ref, vec_ref[2:3, :], vec_ref[6:7, :])
        acc = jnp.dot(h, w4_ref[...], preferred_element_type=jnp.float32) + vec_ref[3:4, :]
        o_ref[...] = acc.astype(o_ref.dtype)

    return kernel


def _build_fcnn_call(Bp, W, tile_b, in_dtype, out_dtype, epilogue_dtype,
                     single_buffer_params, vmem_cap):
    grid = (Bp // tile_b,)
    act_spec = pl.BlockSpec((tile_b, W), lambda i: (i, 0))

    def const_spec(shape):
        if single_buffer_params:
            # Replicated operand (constant index_map): a second pipeline buffer is
            # pure VMEM waste, so request single buffering.
            return pl.BlockSpec(shape, lambda i: (0, 0), pipeline_mode=pl.Buffered(1))
        return pl.BlockSpec(shape, lambda i: (0, 0))

    in_specs = [act_spec,
                const_spec((W, W)), const_spec((W, W)),
                const_spec((W, W)), const_spec((W, W)),
                const_spec((8, W))]

    in_item = jnp.dtype(in_dtype).itemsize
    out_item = jnp.dtype(out_dtype).itemsize
    n_w_bufs = 1 if single_buffer_params else 2
    vmem_bytes = (
        2 * tile_b * W * in_item        # input tile, double-buffered
        + 2 * tile_b * W * out_item     # output tile, double-buffered
        + 4 * n_w_bufs * W * W * 2      # 4 weight matrices, bf16
        + n_w_bufs * 8 * W * 4          # packed bias/alpha rows, f32
        + 6 * tile_b * W * 4            # in-kernel intermediates headroom
    )
    vmem_limit = int(min(vmem_cap, max(16 << 20, vmem_bytes * 3 // 2 + (4 << 20))))

    return pl.pallas_call(
        _make_kernel(epilogue_dtype),
        out_shape=jax.ShapeDtypeStruct((Bp, W), out_dtype),
        grid_spec=pltpu.PrefetchScalarGridSpec(
            num_scalar_prefetch=0,
            grid=grid,
            in_specs=in_specs,
            out_specs=act_spec,
        ),
        compiler_params=pltpu.CompilerParams(
            dimension_semantics=("parallel",),
            vmem_limit_bytes=vmem_limit,
        ),
    )


def fcnn_forward(x, params, *, tile_b=None, out_dtype=None):
    """x: (B, H). params: w{1..4}: (H, H) stored (in, out); b{1..4}, a{1..3}: (1, H)."""
    B, H = x.shape
    out_dtype = x.dtype if out_dtype is None else jnp.dtype(out_dtype)
    kind = _device_kind()
    epilogue_dtype = _epilogue_dtype(kind)
    two_cores = "v7" in kind

    # ---- feature packing strategy -------------------------------------------------
    if H % _LANE == 0:
        G, W, pad_feat = 1, H, 0                      # already lane-dense
    elif H <= 64 and _LANE % H == 0:
        G, W, pad_feat = _LANE // H, _LANE, 0         # fold G rows into one 128-lane row
    else:
        G, W = 1, _round_up(H, _LANE)
        pad_feat = W - H                              # see TODO(synk) above

    # ---- activations: no dtype cast, no feature pad on the packed paths ------------
    xa = x
    if pad_feat:
        xa = jnp.pad(xa, ((0, 0), (0, pad_feat)))
    if G > 1:
        Bg = _round_up(B, G)
        if Bg != B:
            xa = jnp.pad(xa, ((0, Bg - B), (0, 0)))
        xa = xa.reshape(Bg // G, W)                   # free row-major reshape
    Bf = xa.shape[0]

    if tile_b is None:
        tile_b = _pick_tile_b(Bf, two_cores)
    tile_b = max(_SUBLANE_BF16, _round_up(tile_b, _SUBLANE_BF16))
    Bp = _round_up(Bf, tile_b)
    if Bp != Bf:
        xa = jnp.pad(xa, ((0, Bp - Bf), (0, 0)))

    # ---- parameters (tiny, one-time preprocessing; read once per call) -------------
    def prep_w(w):
        w = w.astype(jnp.float32)
        if pad_feat:
            w = jnp.pad(w, ((0, pad_feat), (0, pad_feat)))
        if G > 1:
            w = jnp.kron(jnp.eye(G, dtype=w.dtype), w)   # block-diagonal (W, W)
        return w.astype(jnp.bfloat16)

    def prep_v(v):
        v = v.reshape(1, -1).astype(jnp.float32)
        if pad_feat:
            v = jnp.pad(v, ((0, 0), (0, pad_feat)))
        if G > 1:
            v = jnp.tile(v, (1, G))
        return v

    ws = [prep_w(params[f"w{i}"]) for i in range(1, 5)]
    vec = jnp.concatenate(
        [prep_v(params[f"b{i}"]) for i in range(1, 5)]
        + [prep_v(params[f"a{i}"]) for i in range(1, 4)]
        + [jnp.zeros((1, W), jnp.float32)],
        axis=0)                                          # (8, W): b1..b4, a1..a3, pad

    args = [xa] + ws + [vec]
    vmem_cap = _vmem_cap(kind)

    # Single-buffer the replicated weights only when they are big enough to matter.
    want_single_buffer = (4 * W * W * 2) > (4 << 20)
    if want_single_buffer:
        try:
            out = _build_fcnn_call(Bp, W, tile_b, xa.dtype, out_dtype,
                                   epilogue_dtype, True, vmem_cap)(*args)
        except (TypeError, pltpu.LoweringException):
            out = _build_fcnn_call(Bp, W, tile_b, xa.dtype, out_dtype,
                                   epilogue_dtype, False, vmem_cap)(*args)
    else:
        out = _build_fcnn_call(Bp, W, tile_b, xa.dtype, out_dtype,
                               epilogue_dtype, False, vmem_cap)(*args)

    # ---- unpack (no-op on the fully packed demo path) -------------------------------
    if G > 1:
        out = out.reshape(Bp * G, H)
        if Bp * G != B:
            out = out[:B]
        return out
    if Bp != B or W != H:
        out = out[:B, :H]
    return out


def init_params(key, hidden):
    """Deterministic parameter init mirroring nn.Linear / nn.PReLU shapes."""
    keys = jax.random.split(key, 8)
    scale = 1.0 / jnp.sqrt(hidden)
    params = {}
    for idx, li in enumerate(range(1, 5)):
        # Stored already transposed: (in_features, out_features).
        params[f"w{li}"] = jax.random.uniform(
            keys[2 * idx], (hidden, hidden), jnp.float32, -scale, scale)
        params[f"b{li}"] = jax.random.uniform(
            keys[2 * idx + 1], (1, hidden), jnp.float32, -scale, scale)
    for li in range(1, 4):
        # nn.PReLU(num_parameters=hidden) default init = 0.25 per channel.
        params[f"a{li}"] = jnp.full((1, hidden), 0.25, jnp.float32)
    return params


def fcnn_reference(x, params, matmul_dtype=jnp.float32, epilogue_dtype=jnp.float32):
    """Pure-JAX reference; dtypes let us mirror the kernel's numerics exactly."""
    h = x.astype(matmul_dtype)
    for li in range(1, 4):
        acc = jnp.dot(h, params[f"w{li}"].astype(matmul_dtype),
                      preferred_element_type=jnp.float32)
        acc = (acc + params[f"b{li}"].astype(jnp.float32)).astype(epilogue_dtype)
        a = params[f"a{li}"].astype(epilogue_dtype)
        h = jnp.where(acc > 0, acc, a * acc).astype(matmul_dtype)
    acc = jnp.dot(h, params["w4"].astype(matmul_dtype),
                  preferred_element_type=jnp.float32) + params["b4"].astype(jnp.float32)
    return acc.astype(x.dtype)


if __name__ == "__main__":
    # neurons_per_layer = 32; batch 64 -> folded to a single (16, 128) lane-dense tile.
    BATCH, HIDDEN = 64, 32

    key = jax.random.PRNGKey(0)
    key_x, key_p = jax.random.split(key)
    x = jax.random.normal(key_x, (BATCH, HIDDEN), jnp.float32)
    params = init_params(key_p, HIDDEN)

    out = jax.block_until_ready(fcnn_forward(x, params))
    assert out.shape == (BATCH, HIDDEN)
    assert out.dtype == x.dtype

    # Tight check vs. a reference mirroring the kernel's numerics (bf16 MXU inputs,
    # f32 accumulation, per-chip epilogue dtype).
    epi = _epilogue_dtype()
    ref_match = fcnn_reference(x, params, matmul_dtype=jnp.bfloat16, epilogue_dtype=epi)
    assert jnp.allclose(out, ref_match, atol=2e-3, rtol=2e-3), \
        float(jnp.max(jnp.abs(out - ref_match)))

    # Loose sanity check vs. the full-f32 (PyTorch-equivalent) reference.
    ref_f32 = fcnn_reference(x, params)
    assert jnp.allclose(out, ref_f32, atol=1e-1, rtol=1e-1), \
        float(jnp.max(jnp.abs(out - ref_f32)))

    print("KERNEL_OK")
</pallas_src>

<mosaic_0001>
module attributes {stable_mosaic.version = 11 : i64} {
  func.func @kernel(%arg0: i32, %arg1: memref<16x128xf32, #tpu.memory_space<vmem>>, %arg2: memref<128x128xbf16, #tpu.memory_space<vmem>>, %arg3: memref<128x128xbf16, #tpu.memory_space<vmem>>, %arg4: memref<128x128xbf16, #tpu.memory_space<vmem>>, %arg5: memref<128x128xbf16, #tpu.memory_space<vmem>>, %arg6: memref<8x128xf32, #tpu.memory_space<vmem>>, %arg7: memref<16x128xf32, #tpu.memory_space<vmem>>) attributes {dimension_semantics = [#tpu.dimension_semantics<parallel>], iteration_bounds = array<i64: 1>, scalar_prefetch = 0 : i64, scratch_operands = 0 : i64, tpu.core_type = #tpu.core_type<tc>, window_params = [{transform_indices = @transform_0, window_bounds = array<i64: 16, 128>}, {pipeline_mode = #tpu.pipeline_mode<synchronous>, transform_indices = @transform_1, window_bounds = array<i64: 128, 128>}, {pipeline_mode = #tpu.pipeline_mode<synchronous>, transform_indices = @transform_2, window_bounds = array<i64: 128, 128>}, {pipeline_mode = #tpu.pipeline_mode<synchronous>, transform_indices = @transform_3, window_bounds = array<i64: 128, 128>}, {pipeline_mode = #tpu.pipeline_mode<synchronous>, transform_indices = @transform_4, window_bounds = array<i64: 128, 128>}, {pipeline_mode = #tpu.pipeline_mode<synchronous>, transform_indices = @transform_5, window_bounds = array<i64: 8, 128>}, {transform_indices = @transform_6, window_bounds = array<i64: 16, 128>}]} {
    %c0 = arith.constant 0 : index
    %c0_0 = arith.constant 0 : index
    %0 = vector.load %arg1[%c0, %c0_0] : memref<16x128xf32, #tpu.memory_space<vmem>>, vector<16x128xf32>
    %1 = arith.truncf %0 : vector<16x128xf32> to vector<16x128xbf16>
    %c0_1 = arith.constant 0 : index
    %c0_2 = arith.constant 0 : index
    %2 = vector.load %arg6[%c0_1, %c0_2] : memref<8x128xf32, #tpu.memory_space<vmem>>, vector<1x128xf32>
    %c4 = arith.constant 4 : index
    %c0_3 = arith.constant 0 : index
    %3 = vector.load %arg6[%c4, %c0_3] : memref<8x128xf32, #tpu.memory_space<vmem>>, vector<1x128xf32>
    %c0_4 = arith.constant 0 : index
    %c0_5 = arith.constant 0 : index
    %4 = vector.load %arg2[%c0_4, %c0_5] : memref<128x128xbf16, #tpu.memory_space<vmem>>, vector<128x128xbf16>
    %cst = arith.constant dense<0.000000e+00> : vector<16x128xf32>
    %5 = tpu.matmul %1, %4, %cst {dimension_numbers = #tpu.dot_dimension_numbers<[1], [0], [0], [1], [0, 0, 1, 1], [], []>} : vector<16x128xbf16>, vector<128x128xbf16>, vector<16x128xf32> -> vector<16x128xf32>
    %6 = vector.broadcast %2 : vector<1x128xf32> to vector<16x128xf32>
    %7 = arith.addf %5, %6 : vector<16x128xf32>
    %cst_6 = arith.constant 0.000000e+00 : f32
    %8 = vector.broadcast %cst_6 : f32 to vector<16x128xf32>
    %9 = arith.cmpf ogt, %7, %8 : vector<16x128xf32>
    %10 = vector.broadcast %3 : vector<1x128xf32> to vector<16x128xf32>
    %11 = arith.mulf %10, %7 : vector<16x128xf32>
    %12 = arith.select %9, %7, %11 : vector<16x128xi1>, vector<16x128xf32>
    %13 = arith.truncf %12 : vector<16x128xf32> to vector<16x128xbf16>
    %c1 = arith.constant 1 : index
    %c0_7 = arith.constant 0 : index
    %14 = vector.load %arg6[%c1, %c0_7] : memref<8x128xf32, #tpu.memory_space<vmem>>, vector<1x128xf32>
    %c5 = arith.constant 5 : index
    %c0_8 = arith.constant 0 : index
    %15 = vector.load %arg6[%c5, %c0_8] : memref<8x128xf32, #tpu.memory_space<vmem>>, vector<1x128xf32>
    %c0_9 = arith.constant 0 : index
    %c0_10 = arith.constant 0 : index
    %16 = vector.load %arg3[%c0_9, %c0_10] : memref<128x128xbf16, #tpu.memory_space<vmem>>, vector<128x128xbf16>
    %cst_11 = arith.constant dense<0.000000e+00> : vector<16x128xf32>
    %17 = tpu.matmul %13, %16, %cst_11 {dimension_numbers = #tpu.dot_dimension_numbers<[1], [0], [0], [1], [0, 0, 1, 1], [], []>} : vector<16x128xbf16>, vector<128x128xbf16>, vector<16x128xf32> -> vector<16x128xf32>
    %18 = vector.broadcast %14 : vector<1x128xf32> to vector<16x128xf32>
    %19 = arith.addf %17, %18 : vector<16x128xf32>
    %cst_12 = arith.constant 0.000000e+00 : f32
    %20 = vector.broadcast %cst_12 : f32 to vector<16x128xf32>
    %21 = arith.cmpf ogt, %19, %20 : vector<16x128xf32>
    %22 = vector.broadcast %15 : vector<1x128xf32> to vector<16x128xf32>
    %23 = arith.mulf %22, %19 : vector<16x128xf32>
    %24 = arith.select %21, %19, %23 : vector<16x128xi1>, vector<16x128xf32>
    %25 = arith.truncf %24 : vector<16x128xf32> to vector<16x128xbf16>
    %c2 = arith.constant 2 : index
    %c0_13 = arith.constant 0 : index
    %26 = vector.load %arg6[%c2, %c0_13] : memref<8x128xf32, #tpu.memory_space<vmem>>, vector<1x128xf32>
    %c6 = arith.constant 6 : index
    %c0_14 = arith.constant 0 : index
    %27 = vector.load %arg6[%c6, %c0_14] : memref<8x128xf32, #tpu.memory_space<vmem>>, vector<1x128xf32>
    %c0_15 = arith.constant 0 : index
    %c0_16 = arith.constant 0 : index
    %28 = vector.load %arg4[%c0_15, %c0_16] : memref<128x128xbf16, #tpu.memory_space<vmem>>, vector<128x128xbf16>
    %cst_17 = arith.constant dense<0.000000e+00> : vector<16x128xf32>
    %29 = tpu.matmul %25, %28, %cst_17 {dimension_numbers = #tpu.dot_dimension_numbers<[1], [0], [0], [1], [0, 0, 1, 1], [], []>} : vector<16x128xbf16>, vector<128x128xbf16>, vector<16x128xf32> -> vector<16x128xf32>
    %30 = vector.broadcast %26 : vector<1x128xf32> to vector<16x128xf32>
    %31 = arith.addf %29, %30 : vector<16x128xf32>
    %cst_18 = arith.constant 0.000000e+00 : f32
    %32 = vector.broadcast %cst_18 : f32 to vector<16x128xf32>
    %33 = arith.cmpf ogt, %31, %32 : vector<16x128xf32>
    %34 = vector.broadcast %27 : vector<1x128xf32> to vector<16x128xf32>
    %35 = arith.mulf %34, %31 : vector<16x128xf32>
    %36 = arith.select %33, %31, %35 : vector<16x128xi1>, vector<16x128xf32>
    %37 = arith.truncf %36 : vector<16x128xf32> to vector<16x128xbf16>
    %c0_19 = arith.constant 0 : index
    %c0_20 = arith.constant 0 : index
    %38 = vector.load %arg5[%c0_19, %c0_20] : memref<128x128xbf16, #tpu.memory_space<vmem>>, vector<128x128xbf16>
    %cst_21 = arith.constant dense<0.000000e+00> : vector<16x128xf32>
    %39 = tpu.matmul %37, %38, %cst_21 {dimension_numbers = #tpu.dot_dimension_numbers<[1], [0], [0], [1], [0, 0, 1, 1], [], []>} : vector<16x128xbf16>, vector<128x128xbf16>, vector<16x128xf32> -> vector<16x128xf32>
    %c3 = arith.constant 3 : index
    %c0_22 = arith.constant 0 : index
    %40 = vector.load %arg6[%c3, %c0_22] : memref<8x128xf32, #tpu.memory_space<vmem>>, vector<1x128xf32>
    %41 = vector.broadcast %40 : vector<1x128xf32> to vector<16x128xf32>
    %42 = arith.addf %39, %41 : vector<16x128xf32>
    %c0_23 = arith.constant 0 : index
    %c0_24 = arith.constant 0 : index
    %43 = vector.load %arg7[%c0_23, %c0_24] : memref<16x128xf32, #tpu.memory_space<vmem>>, vector<16x128xf32>
    tpu.vector_store %arg7[%c0_23, %c0_24], %42 {strides = array<i32>} : memref<16x128xf32, #tpu.memory_space<vmem>>, vector<16x128xf32>,
    return
  }
  func.func @transform_0(%arg0: i32) -> (i32, i32) {
    %c0_i32 = arith.constant 0 : i32
    %c0_i32_0 = arith.constant 0 : i32
    return %arg0, %c0_i32 : i32, i32
  }
  func.func @transform_1(%arg0: i32) -> (i32, i32) {
    %c0_i32 = arith.constant 0 : i32
    %c0_i32_0 = arith.constant 0 : i32
    %c0_i32_1 = arith.constant 0 : i32
    return %c0_i32, %c0_i32_0 : i32, i32
  }
  func.func @transform_2(%arg0: i32) -> (i32, i32) {
    %c0_i32 = arith.constant 0 : i32
    %c0_i32_0 = arith.constant 0 : i32
    %c0_i32_1 = arith.constant 0 : i32
    return %c0_i32, %c0_i32_0 : i32, i32
  }
  func.func @transform_3(%arg0: i32) -> (i32, i32) {
    %c0_i32 = arith.constant 0 : i32
    %c0_i32_0 = arith.constant 0 : i32
    %c0_i32_1 = arith.constant 0 : i32
    return %c0_i32, %c0_i32_0 : i32, i32
  }
  func.func @transform_4(%arg0: i32) -> (i32, i32) {
    %c0_i32 = arith.constant 0 : i32
    %c0_i32_0 = arith.constant 0 : i32
    %c0_i32_1 = arith.constant 0 : i32
    return %c0_i32, %c0_i32_0 : i32, i32
  }
  func.func @transform_5(%arg0: i32) -> (i32, i32) {
    %c0_i32 = arith.constant 0 : i32
    %c0_i32_0 = arith.constant 0 : i32
    %c0_i32_1 = arith.constant 0 : i32
    return %c0_i32, %c0_i32_0 : i32, i32
  }
  func.func @transform_6(%arg0: i32) -> (i32, i32) {
    %c0_i32 = arith.constant 0 : i32
    %c0_i32_0 = arith.constant 0 : i32
    return %arg0, %c0_i32 : i32, i32
  }
}

</mosaic_0001>

<llo_original>
// kernel: tpu_custom_call.1
$region0: #{tpu_custom_call.1}
  #allocation0 [shape = 'u32[]', space=smem, size = 0x4, offset = 0x4, fixed_abs, tag = 'smem constant byte address 0x4 - core index']
  #allocation1 [shape = 'u32[144,128]{1,0:T(1,128)}', space=vmem, size = 0x12000, scoped, tag = 'internal scratch']
  %s0 = inlined_call_operand.hbm [shape: f32[16,128], index: 0, kind: input, shape index: {}]
  %s1 = inlined_call_operand.hbm [shape: bf16[128,128], index: 1, kind: input, shape index: {}]
  %s2 = inlined_call_operand.hbm [shape: bf16[128,128], index: 2, kind: input, shape index: {}]
  %s3 = inlined_call_operand.hbm [shape: bf16[128,128], index: 3, kind: input, shape index: {}]
  %s4 = inlined_call_operand.hbm [shape: bf16[128,128], index: 4, kind: input, shape index: {}]
  %s5 = inlined_call_operand.vmem [shape: f32[8,128], index: 5, kind: input, shape index: {}]
  %s6 = inlined_call_operand.hbm [shape: f32[16,128], index: 6, kind: output, shape index: {}]
  %s7 = sld [smem:[#allocation0]]
  $region54: #{tpu_custom_call.1} parent=0
    _
  %s9 = ssub.s32 1, %s7
  %s10 = scalar_select 0, %s9, %s7
  $region1: #{tpu_custom_call.1} parent=0
    #allocation2 [shape = 'u8[8192]{0}', space=vmem, size = 0x2000, scoped, tag = 'input window, operand 0, single buffered']
    #allocation3 [shape = 's32[1]{0}', space=sflag, size = 0x4, scoped, tag = 'scoped memory for tpu_custom_call.1']
    #allocation4 [shape = 's32[1]{0}', space=sflag, size = 0x4, scoped, tag = 'scoped memory for tpu_custom_call.1']
    #allocation5 [shape = 'u8[32768]{0}', space=vmem, size = 0x8000, scoped, tag = 'input window, operand 1, single buffered']
    #allocation6 [shape = 's32[1]{0}', space=sflag, size = 0x4, scoped, tag = 'scoped memory for tpu_custom_call.1']
    #allocation7 [shape = 'u8[32768]{0}', space=vmem, size = 0x8000, scoped, tag = 'input window, operand 2, single buffered']
    #allocation8 [shape = 'u8[32768]{0}', space=vmem, size = 0x8000, scoped, tag = 'input window, operand 3, single buffered']
    #allocation9 [shape = 's32[1]{0}', space=sflag, size = 0x4, scoped, tag = 'scoped memory for tpu_custom_call.1']
    #allocation10 [shape = 'u8[32768]{0}', space=vmem, size = 0x8000, scoped, tag = 'input window, operand 4, single buffered']
    #allocation11 [shape = 'u8[8192]{0}', space=vmem, size = 0x2000, scoped, tag = 'output window, operand 0, single buffered']
    %11 = vsyncpa [#allocation3], 0
    %12 = vsyncpa [#allocation6], 0
    %13 = vsyncpa [#allocation9], 0
    %14 = vsyncpa [#allocation4], 0
    // Predicated region
    $region2: #{tpu_custom_call.1} parent=1 // pred_check
      _
    $region3: #{tpu_custom_call.1} parent=1 // pred_check_branch
      %16 = sbr.rel (0) target = $region5
    $region4: #{tpu_custom_call.1} parent=1 // pred_region
      %s18 = ssub.s32 256, 256
      %19 = vsyncadd [#allocation3], %s18
      %s20 = sshll.u32 [#allocation2], 4
      %s21 = int_to_ptr.vmem [resolvable:$true] %s20
      %26 = dma.hbm_to_vmem [thread:$0]  %s0, 256, %s21, [#allocation3], 128, 128, 8
    $region5: #{tpu_custom_call.1} parent=1 // pred_fallthru
      _
    // Predicated region
    $region6: #{tpu_custom_call.1} parent=1 // pred_check
      _
    $region7: #{tpu_custom_call.1} parent=1 // pred_check_branch
      %28 = sbr.rel (0) target = $region9
    $region8: #{tpu_custom_call.1} parent=1 // pred_region
      %s30 = ssub.s32 1024, 1024
      %31 = vsyncadd [#allocation6], %s30
      %s32 = sshll.u32 [#allocation5], 4
      %s33 = int_to_ptr.vmem [resolvable:$true] %s32
      %38 = dma.hbm_to_vmem [thread:$0]  %s1, 1024, %s33, [#allocation6], 64, 64, 4
    $region9: #{tpu_custom_call.1} parent=1 // pred_fallthru
      _
    // Predicated region
    $region10: #{tpu_custom_call.1} parent=1 // pred_check
      _
    $region11: #{tpu_custom_call.1} parent=1 // pred_check_branch
      %40 = sbr.rel (0) target = $region13
    $region12: #{tpu_custom_call.1} parent=1 // pred_region
      %s42 = ssub.s32 1024, 1024
      %43 = vsyncadd [#allocation6], %s42
      %s44 = sshll.u32 [#allocation7], 4
      %s45 = int_to_ptr.vmem [resolvable:$true] %s44
      %50 = dma.hbm_to_vmem [thread:$0]  %s2, 1024, %s45, [#allocation6], 64, 64, 4
    $region13: #{tpu_custom_call.1} parent=1 // pred_fallthru
      _
    // Predicated region
    $region14: #{tpu_custom_call.1} parent=1 // pred_check
      _
    $region15: #{tpu_custom_call.1} parent=1 // pred_check_branch
      %52 = sbr.rel (0) target = $region17
    $region16: #{tpu_custom_call.1} parent=1 // pred_region
      %s54 = ssub.s32 1024, 1024
      %55 = vsyncadd [#allocation9], %s54
      %s56 = sshll.u32 [#allocation8], 4
      %s57 = int_to_ptr.vmem [resolvable:$true] %s56
      %62 = dma.hbm_to_vmem [thread:$0]  %s3, 1024, %s57, [#allocation9], 64, 64, 4
    $region17: #{tpu_custom_call.1} parent=1 // pred_fallthru
      _
    // Predicated region
    $region18: #{tpu_custom_call.1} parent=1 // pred_check
      _
    $region19: #{tpu_custom_call.1} parent=1 // pred_check_branch
      %64 = sbr.rel (0) target = $region21
    $region20: #{tpu_custom_call.1} parent=1 // pred_region
      %s66 = ssub.s32 1024, 1024
      %67 = vsyncadd [#allocation9], %s66
      %s68 = sshll.u32 [#allocation10], 4
      %s69 = int_to_ptr.vmem [resolvable:$true] %s68
      %74 = dma.hbm_to_vmem [thread:$0]  %s4, 1024, %s69, [#allocation9], 64, 64, 4
    $region21: #{tpu_custom_call.1} parent=1 // pred_fallthru
      _
    // Predicated region
    $region22: #{tpu_custom_call.1} parent=1 // pred_check
      _
    $region23: #{tpu_custom_call.1} parent=1 // pred_check_branch
      %76 = sbr.rel (0) target = $region25
    $region24: #{tpu_custom_call.1} parent=1 // pred_region
      _
    $region25: #{tpu_custom_call.1} parent=1 // pred_fallthru
      _
    // Predicated region
    $region26: #{tpu_custom_call.1} parent=1 // pred_check
      _
    $region27: #{tpu_custom_call.1} parent=1 // pred_check_branch
      %78 = sbr.rel (0) target = $region29
    $region28: #{tpu_custom_call.1} parent=1 // pred_region
      %79 = dma.done [#allocation3], 256
    $region29: #{tpu_custom_call.1} parent=1 // pred_fallthru
      _
    // Predicated region
    $region30: #{tpu_custom_call.1} parent=1 // pred_check
      _
    $region31: #{tpu_custom_call.1} parent=1 // pred_check_branch
      %81 = sbr.rel (0) target = $region33
    $region32: #{tpu_custom_call.1} parent=1 // pred_region
      %82 = dma.done [#allocation6], 1024
    $region33: #{tpu_custom_call.1} parent=1 // pred_fallthru
      _
    // Predicated region
    $region34: #{tpu_custom_call.1} parent=1 // pred_check
      _
    $region35: #{tpu_custom_call.1} parent=1 // pred_check_branch
      %84 = sbr.rel (0) target = $region37
    $region36: #{tpu_custom_call.1} parent=1 // pred_region
      %85 = dma.done [#allocation6], 1024
    $region37: #{tpu_custom_call.1} parent=1 // pred_fallthru
      _
    // Predicated region
    $region38: #{tpu_custom_call.1} parent=1 // pred_check
      _
    $region39: #{tpu_custom_call.1} parent=1 // pred_check_branch
      %87 = sbr.rel (0) target = $region41
    $region40: #{tpu_custom_call.1} parent=1 // pred_region
      %88 = dma.done [#allocation9], 1024
    $region41: #{tpu_custom_call.1} parent=1 // pred_fallthru
      _
    // Predicated region
    $region42: #{tpu_custom_call.1} parent=1 // pred_check
      _
    $region43: #{tpu_custom_call.1} parent=1 // pred_check_branch
      %90 = sbr.rel (0) target = $region45
    $region44: #{tpu_custom_call.1} parent=1 // pred_region
      %91 = dma.done [#allocation9], 1024
    $region45: #{tpu_custom_call.1} parent=1 // pred_fallthru
      _
    %v93 = vld [vmem:[#allocation2] sm:$0xff]
    %v94 = vld [vmem:[#allocation2 + $0x8] sm:$0xff]
    %v95 = vpack.c.bf16 %v94, %v93
    %v96 = vld [vmem:[%s5] sm:$0x1]
    %v97 = vld [vmem:[%s5 + $0x4] sm:$0x1]
    %v98 = vld [vmem:[#allocation5] sm:$0xf]
    %v99 = vld [vmem:[#allocation5 + $0x4] sm:$0xf]
    %v100 = vld [vmem:[#allocation5 + $0x8] sm:$0xf]
    %v101 = vld [vmem:[#allocation5 + $0xc] sm:$0xf]
    %v102 = vld [vmem:[#allocation5 + $0x10] sm:$0xf]
    %v103 = vld [vmem:[#allocation5 + $0x14] sm:$0xf]
    %v104 = vld [vmem:[#allocation5 + $0x18] sm:$0xf]
    %v105 = vld [vmem:[#allocation5 + $0x1c] sm:$0xf]
    %v106 = vld [vmem:[#allocation5 + $0x20] sm:$0xf]
    %v107 = vld [vmem:[#allocation5 + $0x24] sm:$0xf]
    %v108 = vld [vmem:[#allocation5 + $0x28] sm:$0xf]
    %v109 = vld [vmem:[#allocation5 + $0x2c] sm:$0xf]
    %v110 = vld [vmem:[#allocation5 + $0x30] sm:$0xf]
    %v111 = vld [vmem:[#allocation5 + $0x34] sm:$0xf]
    %v112 = vld [vmem:[#allocation5 + $0x38] sm:$0xf]
    %v113 = vld [vmem:[#allocation5 + $0x3c] sm:$0xf]
    %v114 = vlaneseq
    %v115 = vshrl.u32 %v114, 7
    %v116 = vsub.s32 0, %v115
    %v117 = vrot.slane %v96, %v116
    %v134 = vunpack.c.l.b16 %v98
    %v135 = vunpack.c.l.b16 %v99
    %v136 = vunpack.c.l.b16 %v100
    %v137 = vunpack.c.l.b16 %v101
    %v138 = vunpack.c.l.b16 %v102
    %v139 = vunpack.c.l.b16 %v103
    %v140 = vunpack.c.l.b16 %v104
    %v141 = vunpack.c.l.b16 %v105
    %v142 = vunpack.c.l.b16 %v106
    %v143 = vunpack.c.l.b16 %v107
    %v144 = vunpack.c.l.b16 %v108
    %v145 = vunpack.c.l.b16 %v109
    %v146 = vunpack.c.l.b16 %v110
    %v147 = vunpack.c.l.b16 %v111
    %v148 = vunpack.c.l.b16 %v112
    %v149 = vunpack.c.l.b16 %v113
    %v150 = vpack.c.b16 %v135, %v134
    %v151 = vpack.c.b16 %v137, %v136
    %v152 = vpack.c.b16 %v139, %v138
    %v153 = vpack.c.b16 %v141, %v140
    %v154 = vpack.c.b16 %v143, %v142
    %v155 = vpack.c.b16 %v145, %v144
    %v156 = vpack.c.b16 %v147, %v146
    %v157 = vpack.c.b16 %v149, %v148
    %166 = vmatprep.subr.bf16.mxu0 0
    %167 = vmatpush1.bf16.msra.mxu0 %v150
    %168 = vmatprep.subr.bf16.mxu0 0
    %169 = vmatpush1.bf16.msra.mxu0 %v151
    %170 = vmatprep.subr.bf16.mxu0 0
    %171 = vmatpush1.bf16.msra.mxu0 %v152
    %172 = vmatprep.subr.bf16.mxu0 0
    %173 = vmatpush1.bf16.msra.mxu0 %v153
    %174 = vmatprep.subr.bf16.mxu0 0
    %175 = vmatpush1.bf16.msra.mxu0 %v154
    %176 = vmatprep.subr.bf16.mxu0 0
    %177 = vmatpush1.bf16.msra.mxu0 %v155
    %178 = vmatprep.subr.bf16.mxu0 0
    %179 = vmatpush1.bf16.msra.mxu0 %v156
    %180 = vmatprep.subr.bf16.mxu0 0
    %181 = vmatpush1.bf16.msra.mxu0 %v157
    %182 = vmatprep.subr.bf16.mxu0 0
    %183 = vmatpush1.bf16.msra.mxu0 0
    %184 = vmatprep.subr.bf16.mxu0 0
    %185 = vmatpush1.bf16.msra.mxu0 0
    %186 = vmatprep.subr.bf16.mxu0 0
    %187 = vmatpush1.bf16.msra.mxu0 0
    %188 = vmatprep.subr.bf16.mxu0 0
    %189 = vmatpush1.bf16.msra.mxu0 0
    %190 = vmatprep.subr.bf16.mxu0 0
    %191 = vmatpush1.bf16.msra.mxu0 0
    %192 = vmatprep.subr.bf16.mxu0 0
    %193 = vmatpush1.bf16.msra.mxu0 0
    %194 = vmatprep.subr.bf16.mxu0 0
    %195 = vmatpush1.bf16.msra.mxu0 0
    %196 = vmatprep.subr.bf16.mxu0 0
    %197 = vmatpush1.bf16.msra.mxu0 0
    %198 = vmatprep.mubr.bf16.mxu0 0
    %199 = vmatmul.mubr.bf16.gmra.mrb[0].mxu0 %v95
    %v200 = vpop.f32.mrb[0].mxu0
    %v201 = vadd.f32 %v117, %v200
    %v202 = vpop.f32.mrb[0].mxu0
    %v203 = vpop.f32.mrb[0].mxu0
    %v204 = vadd.f32 %v117, %v203
    %v205 = vpop.f32.mrb[0].mxu0
    %206 = vdwg.mxu0
    %vm207 = vcmp.gt.f32.partialorder %v201, 0.0
    %vm208 = vcmp.gt.f32.partialorder %v204, 0.0
    %v209 = vlaneseq
    %v210 = vshrl.u32 %v209, 7
    %v211 = vsub.s32 0, %v210
    %v212 = vrot.slane %v97, %v211
    %v213 = vmul.f32 %v212, %v201
    %v214 = vmul.f32 %v212, %v204
    %v215 = vsel %vm207, %v201, %v213
    %v216 = vsel %vm208, %v204, %v214
    %v217 = vpack.c.bf16 %v216, %v215
    %v218 = vld [vmem:[%s5 + $0x1] sm:$0x1]
    %v219 = vld [vmem:[%s5 + $0x5] sm:$0x1]
    %v220 = vld [vmem:[#allocation7] sm:$0xf]
    %v221 = vld [vmem:[#allocation7 + $0x4] sm:$0xf]
    %v222 = vld [vmem:[#allocation7 + $0x8] sm:$0xf]
    %v223 = vld [vmem:[#allocation7 + $0xc] sm:$0xf]
    %v224 = vld [vmem:[#allocation7 + $0x10] sm:$0xf]
    %v225 = vld [vmem:[#allocation7 + $0x14] sm:$0xf]
    %v226 = vld [vmem:[#allocation7 + $0x18] sm:$0xf]
    %v227 = vld [vmem:[#allocation7 + $0x1c] sm:$0xf]
    %v228 = vld [vmem:[#allocation7 + $0x20] sm:$0xf]
    %v229 = vld [vmem:[#allocation7 + $0x24] sm:$0xf]
    %v230 = vld [vmem:[#allocation7 + $0x28] sm:$0xf]
    %v231 = vld [vmem:[#allocation7 + $0x2c] sm:$0xf]
    %v232 = vld [vmem:[#allocation7 + $0x30] sm:$0xf]
    %v233 = vld [vmem:[#allocation7 + $0x34] sm:$0xf]
    %v234 = vld [vmem:[#allocation7 + $0x38] sm:$0xf]
    %v235 = vld [vmem:[#allocation7 + $0x3c] sm:$0xf]
    %v236 = vlaneseq
    %v237 = vshrl.u32 %v236, 7
    %v238 = vsub.s32 0, %v237
    %v239 = vrot.slane %v218, %v238
    %v256 = vunpack.c.l.b16 %v220
    %v257 = vunpack.c.l.b16 %v221
    %v258 = vunpack.c.l.b16 %v222
    %v259 = vunpack.c.l.b16 %v223
    %v260 = vunpack.c.l.b16 %v224
    %v261 = vunpack.c.l.b16 %v225
    %v262 = vunpack.c.l.b16 %v226
    %v263 = vunpack.c.l.b16 %v227
    %v264 = vunpack.c.l.b16 %v228
    %v265 = vunpack.c.l.b16 %v229
    %v266 = vunpack.c.l.b16 %v230
    %v267 = vunpack.c.l.b16 %v231
    %v268 = vunpack.c.l.b16 %v232
    %v269 = vunpack.c.l.b16 %v233
    %v270 = vunpack.c.l.b16 %v234
    %v271 = vunpack.c.l.b16 %v235
    %v272 = vpack.c.b16 %v257, %v256
    %v273 = vpack.c.b16 %v259, %v258
    %v274 = vpack.c.b16 %v261, %v260
    %v275 = vpack.c.b16 %v263, %v262
    %v276 = vpack.c.b16 %v265, %v264
    %v277 = vpack.c.b16 %v267, %v266
    %v278 = vpack.c.b16 %v269, %v268
    %v279 = vpack.c.b16 %v271, %v270
    %288 = vmatprep.subr.bf16.mxu0 0
    %289 = vmatpush1.bf16.msra.mxu0 %v272
    %290 = vmatprep.subr.bf16.mxu0 0
    %291 = vmatpush1.bf16.msra.mxu0 %v273
    %292 = vmatprep.subr.bf16.mxu0 0
    %293 = vmatpush1.bf16.msra.mxu0 %v274
    %294 = vmatprep.subr.bf16.mxu0 0
    %295 = vmatpush1.bf16.msra.mxu0 %v275
    %296 = vmatprep.subr.bf16.mxu0 0
    %297 = vmatpush1.bf16.msra.mxu0 %v276
    %298 = vmatprep.subr.bf16.mxu0 0
    %299 = vmatpush1.bf16.msra.mxu0 %v277
    %300 = vmatprep.subr.bf16.mxu0 0
    %301 = vmatpush1.bf16.msra.mxu0 %v278
    %302 = vmatprep.subr.bf16.mxu0 0
    %303 = vmatpush1.bf16.msra.mxu0 %v279
    %304 = vmatprep.subr.bf16.mxu0 0
    %305 = vmatpush1.bf16.msra.mxu0 0
    %306 = vmatprep.subr.bf16.mxu0 0
    %307 = vmatpush1.bf16.msra.mxu0 0
    %308 = vmatprep.subr.bf16.mxu0 0
    %309 = vmatpush1.bf16.msra.mxu0 0
    %310 = vmatprep.subr.bf16.mxu0 0
    %311 = vmatpush1.bf16.msra.mxu0 0
    %312 = vmatprep.subr.bf16.mxu0 0
    %313 = vmatpush1.bf16.msra.mxu0 0
    %314 = vmatprep.subr.bf16.mxu0 0
    %315 = vmatpush1.bf16.msra.mxu0 0
    %316 = vmatprep.subr.bf16.mxu0 0
    %317 = vmatpush1.bf16.msra.mxu0 0
    %318 = vmatprep.subr.bf16.mxu0 0
    %319 = vmatpush1.bf16.msra.mxu0 0
    %320 = vmatprep.mubr.bf16.mxu0 0
    %321 = vmatmul.mubr.bf16.gmra.mrb[0].mxu0 %v217
    %v322 = vpop.f32.mrb[0].mxu0
    %v323 = vadd.f32 %v239, %v322
    %v324 = vpop.f32.mrb[0].mxu0
    %v325 = vpop.f32.mrb[0].mxu0
    %v326 = vadd.f32 %v239, %v325
    %v327 = vpop.f32.mrb[0].mxu0
    %328 = vdwg.mxu0
    %vm329 = vcmp.gt.f32.partialorder %v323, 0.0
    %vm330 = vcmp.gt.f32.partialorder %v326, 0.0
    %v331 = vlaneseq
    %v332 = vshrl.u32 %v331, 7
    %v333 = vsub.s32 0, %v332
    %v334 = vrot.slane %v219, %v333
    %v335 = vmul.f32 %v334, %v323
    %v336 = vmul.f32 %v334, %v326
    %v337 = vsel %vm329, %v323, %v335
    %v338 = vsel %vm330, %v326, %v336
    %v339 = vpack.c.bf16 %v338, %v337
    %v340 = vld [vmem:[%s5 + $0x2] sm:$0x1]
    %v341 = vld [vmem:[%s5 + $0x6] sm:$0x1]
    %v342 = vld [vmem:[#allocation8] sm:$0xf]
    %v343 = vld [vmem:[#allocation8 + $0x4] sm:$0xf]
    %v344 = vld [vmem:[#allocation8 + $0x8] sm:$0xf]
    %v345 = vld [vmem:[#allocation8 + $0xc] sm:$0xf]
    %v346 = vld [vmem:[#allocation8 + $0x10] sm:$0xf]
    %v347 = vld [vmem:[#allocation8 + $0x14] sm:$0xf]
    %v348 = vld [vmem:[#allocation8 + $0x18] sm:$0xf]
    %v349 = vld [vmem:[#allocation8 + $0x1c] sm:$0xf]
    %v350 = vld [vmem:[#allocation8 + $0x20] sm:$0xf]
    %v351 = vld [vmem:[#allocation8 + $0x24] sm:$0xf]
    %v352 = vld [vmem:[#allocation8 + $0x28] sm:$0xf]
    %v353 = vld [vmem:[#allocation8 + $0x2c] sm:$0xf]
    %v354 = vld [vmem:[#allocation8 + $0x30] sm:$0xf]
    %v355 = vld [vmem:[#allocation8 + $0x34] sm:$0xf]
    %v356 = vld [vmem:[#allocation8 + $0x38] sm:$0xf]
    %v357 = vld [vmem:[#allocation8 + $0x3c] sm:$0xf]
    %v358 = vlaneseq
    %v359 = vshrl.u32 %v358, 7
    %v360 = vsub.s32 0, %v359
    %v361 = vrot.slane %v340, %v360
    %v378 = vunpack.c.l.b16 %v342
    %v379 = vunpack.c.l.b16 %v343
    %v380 = vunpack.c.l.b16 %v344
    %v381 = vunpack.c.l.b16 %v345
    %v382 = vunpack.c.l.b16 %v346
    %v383 = vunpack.c.l.b16 %v347
    %v384 = vunpack.c.l.b16 %v348
    %v385 = vunpack.c.l.b16 %v349
    %v386 = vunpack.c.l.b16 %v350
    %v387 = vunpack.c.l.b16 %v351
    %v388 = vunpack.c.l.b16 %v352
    %v389 = vunpack.c.l.b16 %v353
    %v390 = vunpack.c.l.b16 %v354
    %v391 = vunpack.c.l.b16 %v355
    %v392 = vunpack.c.l.b16 %v356
    %v393 = vunpack.c.l.b16 %v357
    %v394 = vpack.c.b16 %v379, %v378
    %v395 = vpack.c.b16 %v381, %v380
    %v396 = vpack.c.b16 %v383, %v382
    %v397 = vpack.c.b16 %v385, %v384
    %v398 = vpack.c.b16 %v387, %v386
    %v399 = vpack.c.b16 %v389, %v388
    %v400 = vpack.c.b16 %v391, %v390
    %v401 = vpack.c.b16 %v393, %v392
    %410 = vmatprep.subr.bf16.mxu0 0
    %411 = vmatpush1.bf16.msra.mxu0 %v394
    %412 = vmatprep.subr.bf16.mxu0 0
    %413 = vmatpush1.bf16.msra.mxu0 %v395
    %414 = vmatprep.subr.bf16.mxu0 0
    %415 = vmatpush1.bf16.msra.mxu0 %v396
    %416 = vmatprep.subr.bf16.mxu0 0
    %417 = vmatpush1.bf16.msra.mxu0 %v397
    %418 = vmatprep.subr.bf16.mxu0 0
    %419 = vmatpush1.bf16.msra.mxu0 %v398
    %420 = vmatprep.subr.bf16.mxu0 0
    %421 = vmatpush1.bf16.msra.mxu0 %v399
    %422 = vmatprep.subr.bf16.mxu0 0
    %423 = vmatpush1.bf16.msra.mxu0 %v400
    %424 = vmatprep.subr.bf16.mxu0 0
    %425 = vmatpush1.bf16.msra.mxu0 %v401
    %426 = vmatprep.subr.bf16.mxu0 0
    %427 = vmatpush1.bf16.msra.mxu0 0
    %428 = vmatprep.subr.bf16.mxu0 0
    %429 = vmatpush1.bf16.msra.mxu0 0
    %430 = vmatprep.subr.bf16.mxu0 0
    %431 = vmatpush1.bf16.msra.mxu0 0
    %432 = vmatprep.subr.bf16.mxu0 0
    %433 = vmatpush1.bf16.msra.mxu0 0
    %434 = vmatprep.subr.bf16.mxu0 0
    %435 = vmatpush1.bf16.msra.mxu0 0
    %436 = vmatprep.subr.bf16.mxu0 0
    %437 = vmatpush1.bf16.msra.mxu0 0
    %438 = vmatprep.subr.bf16.mxu0 0
    %439 = vmatpush1.bf16.msra.mxu0 0
    %440 = vmatprep.subr.bf16.mxu0 0
    %441 = vmatpush1.bf16.msra.mxu0 0
    %442 = vmatprep.mubr.bf16.mxu0 0
    %443 = vmatmul.mubr.bf16.gmra.mrb[0].mxu0 %v339
    %v444 = vpop.f32.mrb[0].mxu0
    %v445 = vadd.f32 %v361, %v444
    %v446 = vpop.f32.mrb[0].mxu0
    %v447 = vpop.f32.mrb[0].mxu0
    %v448 = vadd.f32 %v361, %v447
    %v449 = vpop.f32.mrb[0].mxu0
    %450 = vdwg.mxu0
    %vm451 = vcmp.gt.f32.partialorder %v445, 0.0
    %vm452 = vcmp.gt.f32.partialorder %v448, 0.0
    %v453 = vlaneseq
    %v454 = vshrl.u32 %v453, 7
    %v455 = vsub.s32 0, %v454
    %v456 = vrot.slane %v341, %v455
    %v457 = vmul.f32 %v456, %v445
    %v458 = vmul.f32 %v456, %v448
    %v459 = vsel %vm451, %v445, %v457
    %v460 = vsel %vm452, %v448, %v458
    %v461 = vpack.c.bf16 %v460, %v459
    %v462 = vld [vmem:[#allocation10] sm:$0xf]
    %v463 = vld [vmem:[#allocation10 + $0x4] sm:$0xf]
    %v464 = vld [vmem:[#allocation10 + $0x8] sm:$0xf]
    %v465 = vld [vmem:[#allocation10 + $0xc] sm:$0xf]
    %v466 = vld [vmem:[#allocation10 + $0x10] sm:$0xf]
    %v467 = vld [vmem:[#allocation10 + $0x14] sm:$0xf]
    %v468 = vld [vmem:[#allocation10 + $0x18] sm:$0xf]
    %v469 = vld [vmem:[#allocation10 + $0x1c] sm:$0xf]
    %v470 = vld [vmem:[#allocation10 + $0x20] sm:$0xf]
    %v471 = vld [vmem:[#allocation10 + $0x24] sm:$0xf]
    %v472 = vld [vmem:[#allocation10 + $0x28] sm:$0xf]
    %v473 = vld [vmem:[#allocation10 + $0x2c] sm:$0xf]
    %v474 = vld [vmem:[#allocation10 + $0x30] sm:$0xf]
    %v475 = vld [vmem:[#allocation10 + $0x34] sm:$0xf]
    %v476 = vld [vmem:[#allocation10 + $0x38] sm:$0xf]
    %v477 = vld [vmem:[#allocation10 + $0x3c] sm:$0xf]
    %v478 = vld [vmem:[%s5 + $0x3] sm:$0x1]
    %v479 = vlaneseq
    %v480 = vshrl.u32 %v479, 7
    %v481 = vsub.s32 0, %v480
    %v482 = vrot.slane %v478, %v481
    %v499 = vunpack.c.l.b16 %v462
    %v500 = vunpack.c.l.b16 %v463
    %v501 = vunpack.c.l.b16 %v464
    %v502 = vunpack.c.l.b16 %v465
    %v503 = vunpack.c.l.b16 %v466
    %v504 = vunpack.c.l.b16 %v467
    %v505 = vunpack.c.l.b16 %v468
    %v506 = vunpack.c.l.b16 %v469
    %v507 = vunpack.c.l.b16 %v470
    %v508 = vunpack.c.l.b16 %v471
    %v509 = vunpack.c.l.b16 %v472
    %v510 = vunpack.c.l.b16 %v473
    %v511 = vunpack.c.l.b16 %v474
    %v512 = vunpack.c.l.b16 %v475
    %v513 = vunpack.c.l.b16 %v476
    %v514 = vunpack.c.l.b16 %v477
    %v515 = vpack.c.b16 %v500, %v499
    %v516 = vpack.c.b16 %v502, %v501
    %v517 = vpack.c.b16 %v504, %v503
    %v518 = vpack.c.b16 %v506, %v505
    %v519 = vpack.c.b16 %v508, %v507
    %v520 = vpack.c.b16 %v510, %v509
    %v521 = vpack.c.b16 %v512, %v511
    %v522 = vpack.c.b16 %v514, %v513
    %531 = vmatprep.subr.bf16.mxu0 0
    %532 = vmatpush1.bf16.msra.mxu0 %v515
    %533 = vmatprep.subr.bf16.mxu0 0
    %534 = vmatpush1.bf16.msra.mxu0 %v516
    %535 = vmatprep.subr.bf16.mxu0 0
    %536 = vmatpush1.bf16.msra.mxu0 %v517
    %537 = vmatprep.subr.bf16.mxu0 0
    %538 = vmatpush1.bf16.msra.mxu0 %v518
    %539 = vmatprep.subr.bf16.mxu0 0
    %540 = vmatpush1.bf16.msra.mxu0 %v519
    %541 = vmatprep.subr.bf16.mxu0 0
    %542 = vmatpush1.bf16.msra.mxu0 %v520
    %543 = vmatprep.subr.bf16.mxu0 0
    %544 = vmatpush1.bf16.msra.mxu0 %v521
    %545 = vmatprep.subr.bf16.mxu0 0
    %546 = vmatpush1.bf16.msra.mxu0 %v522
    %547 = vmatprep.subr.bf16.mxu0 0
    %548 = vmatpush1.bf16.msra.mxu0 0
    %549 = vmatprep.subr.bf16.mxu0 0
    %550 = vmatpush1.bf16.msra.mxu0 0
    %551 = vmatprep.subr.bf16.mxu0 0
    %552 = vmatpush1.bf16.msra.mxu0 0
    %553 = vmatprep.subr.bf16.mxu0 0
    %554 = vmatpush1.bf16.msra.mxu0 0
    %555 = vmatprep.subr.bf16.mxu0 0
    %556 = vmatpush1.bf16.msra.mxu0 0
    %557 = vmatprep.subr.bf16.mxu0 0
    %558 = vmatpush1.bf16.msra.mxu0 0
    %559 = vmatprep.subr.bf16.mxu0 0
    %560 = vmatpush1.bf16.msra.mxu0 0
    %561 = vmatprep.subr.bf16.mxu0 0
    %562 = vmatpush1.bf16.msra.mxu0 0
    %563 = vmatprep.mubr.bf16.mxu0 0
    %564 = vmatmul.mubr.bf16.gmra.mrb[0].mxu0 %v461
    %v565 = vpop.f32.mrb[0].mxu0
    %v566 = vadd.f32 %v482, %v565
    %v567 = vpop.f32.mrb[0].mxu0
    %v568 = vpop.f32.mrb[0].mxu0
    %v569 = vadd.f32 %v482, %v568
    %v570 = vpop.f32.mrb[0].mxu0
    %571 = vdwg.mxu0
    %572 = vst [vmem:[#allocation11] sm:$0xff] %v566
    %573 = vst [vmem:[#allocation11 + $0x8] sm:$0xff] %v569
    // Predicated region
    $region46: #{tpu_custom_call.1} parent=1 // pred_check
      _
    $region47: #{tpu_custom_call.1} parent=1 // pred_check_branch
      %575 = sbr.rel (0) target = $region49
    $region48: #{tpu_custom_call.1} parent=1 // pred_region
      %s577 = ssub.s32 256, 256
      %578 = vsyncadd [#allocation4], %s577
      %s579 = sshll.u32 [#allocation11], 4
      %s580 = int_to_ptr.vmem [resolvable:$true] %s579
      %585 = dma.vmem_to_hbm [thread:$0]  %s580, 256, %s6, [#allocation4], 128, 128, 8
    $region49: #{tpu_custom_call.1} parent=1 // pred_fallthru
      _
    // Predicated region
    $region50: #{tpu_custom_call.1} parent=1 // pred_check
      _
    $region51: #{tpu_custom_call.1} parent=1 // pred_check_branch
      %587 = sbr.rel (0) target = $region53
    $region52: #{tpu_custom_call.1} parent=1 // pred_region
      %588 = dma.done [#allocation4], 256
    $region53: #{tpu_custom_call.1} parent=1 // pred_fallthru
      _
    %589 = vsyncpa [#allocation3], 1
    %590 = vsyncpa [#allocation6], 1
    %591 = vsyncpa [#allocation9], 1
    %592 = vsyncpa [#allocation4], 1

</llo_original>
